<compile_context>
chip_gen: v7x
topology: tpu7x:2x2x1
jax: 0.10.0
libtpu: 0.0.40
codegen_flags: <defaults>
</compile_context>

<pallas_src>
import jax
import jax.numpy as jnp
from jax.experimental import pallas as pl
from jax.experimental.pallas import tpu as pltpu


def _feature_correlation_kernel(a_ref, b_ref, inv_ref, o_ref):
    # a_ref:   (1, C,   TNA)  -- native-layout f_A tile (channels on sublanes)
    # b_ref:   (1, C,   TNB)  -- native-layout f_B tile
    # inv_ref: (1, TNA, 1)    -- precomputed 1/||A_row||, f32
    # o_ref:   (1, TNA, TNB)
    a = a_ref[0]                        # (C, TNA)
    bm = b_ref[0]                       # (C, TNB)
    inv = inv_ref[0]                    # (TNA, 1) f32

    # MXU matmul contracting over channels: (TNA, C) x (C, TNB) with the LHS
    # consumed in its transposed (C, TNA) layout -> no HBM transpose needed.
    f_mul = jax.lax.dot_general(
        a, bm,
        dimension_numbers=(((0,), (0,)), ((), ())),
        preferred_element_type=jnp.float32,
    )                                   # (TNA, TNB) f32

    # Row-wise normalization: one VPU broadcast-multiply (no per-element divide).
    o_ref[0] = (f_mul * inv).astype(o_ref.dtype)


def _pick_tile(n, preferred, align):
    """Largest tile <= preferred that divides n and is a multiple of `align`;
    fall back to the full dimension (valid as a full-extent block)."""
    if n <= preferred:
        return n
    best = None
    for t in range(align, preferred + 1, align):
        if n % t == 0:
            best = t
    return best if best is not None else n


def feature_correlation(f_A, f_B, *, tna_target=256, tnb_target=1024):
    """JAX/Pallas equivalent of FeatureCorrelation.forward."""
    b, c, l0, h0, w0 = f_A.shape
    b2, c2, l, h, w = f_B.shape
    assert b == b2 and c == c2
    NA = l0 * h0 * w0
    NB = l * h * w

    # Pure reshapes (no data movement): keep both operands in native NCDHW layout.
    a_native = f_A.reshape(b, c, NA)            # (b, C, NA)
    b_native = f_B.reshape(b, c, NB)            # (b, C, NB)

    # Inverse L2 norm of each f_A feature vector (over channels), precomputed
    # once (cheap O(b*C*NA) reduce) so the kernel epilogue is a single multiply
    # and every grid axis stays parallel.
    inv_norm = jax.lax.rsqrt(
        jnp.sum(jnp.square(a_native.astype(jnp.float32)), axis=1)
    )[:, :, None]                               # (b, NA, 1) f32

    # Tile sizes: lane-dense output tiles (multiples of 128), sized to stay
    # well inside every generation's VMEM budget (v7x: 64 MiB physical).
    tna = _pick_tile(NA, tna_target, 128)       # also multiple of 8 for out sublanes
    tnb = _pick_tile(NB, tnb_target, 128)
    grid = (b, NA // tna, NB // tnb)

    out = pl.pallas_call(
        _feature_correlation_kernel,
        out_shape=jax.ShapeDtypeStruct((b, NA, NB), f_A.dtype),
        grid_spec=pltpu.PrefetchScalarGridSpec(
            num_scalar_prefetch=0,
            grid=grid,
            in_specs=[
                pl.BlockSpec((1, c, tna), lambda i, na, nb: (i, 0, na)),
                pl.BlockSpec((1, c, tnb), lambda i, na, nb: (i, 0, nb)),
                pl.BlockSpec((1, tna, 1), lambda i, na, nb: (i, na, 0)),
            ],
            out_specs=pl.BlockSpec((1, tna, tnb), lambda i, na, nb: (i, na, nb)),
        ),
        compiler_params=pltpu.CompilerParams(
            # Every output tile is written exactly once and there is no
            # cross-iteration state -> all axes parallel (v7x 2-TC sharding).
            dimension_semantics=("parallel", "parallel", "parallel"),
            vmem_limit_bytes=32 * 1024 * 1024,
        ),
    )(a_native, b_native, inv_norm)

    # Same row-major reinterpretation as torch .view on a contiguous tensor.
    return out.reshape(b, l, h, w, NA)


def _reference(f_A, f_B):
    """Pure-JAX reference mirroring the PyTorch code (for correctness check)."""
    b, c, l0, h0, w0 = f_A.shape
    _, _, l, h, w = f_B.shape
    A = jnp.transpose(f_A, (0, 2, 3, 4, 1)).reshape(b, -1, c)
    B = f_B.reshape(b, c, -1)
    f_mul = jnp.einsum("bnc,bcm->bnm", A, B)
    norm = jnp.sqrt(jnp.sum(A * A, axis=-1, keepdims=True))
    return (f_mul / norm).reshape(b, l, h, w, l0 * h0 * w0)


if __name__ == "__main__":
    key = jax.random.PRNGKey(0)
    k1, k2, k3, k4 = jax.random.split(key, 4)

    b, c = 2, 4

    # Check 1: small shapes, single-block path (NA=64, NB=512).
    f_A = jax.random.normal(k1, (b, c, 4, 4, 4), dtype=jnp.float32)
    f_B = jax.random.normal(k2, (b, c, 8, 8, 8), dtype=jnp.float32)
    out = jax.block_until_ready(feature_correlation(f_A, f_B))
    ref = jax.block_until_ready(_reference(f_A, f_B))
    assert out.shape == (b, 8, 8, 8, 4 * 4 * 4), out.shape
    assert jnp.allclose(out, ref, atol=1e-4, rtol=1e-4), "mismatch vs reference (small)"

    # Check 2: exercises the tiled grid (NA=512 -> TNA=256, 2 NA tiles).
    f_A2 = jax.random.normal(k3, (b, c, 8, 8, 8), dtype=jnp.float32)
    f_B2 = jax.random.normal(k4, (b, c, 8, 8, 8), dtype=jnp.float32)
    out2 = jax.block_until_ready(feature_correlation(f_A2, f_B2))
    ref2 = jax.block_until_ready(_reference(f_A2, f_B2))
    assert out2.shape == (b, 8, 8, 8, 8 * 8 * 8), out2.shape
    assert jnp.allclose(out2, ref2, atol=1e-4, rtol=1e-4), "mismatch vs reference (tiled)"

    print("KERNEL_OK")
</pallas_src>

<mosaic_0001>
module attributes {stable_mosaic.version = 11 : i64} {
  func.func @_feature_correlation_kernel(%arg0: i32, %arg1: i32, %arg2: i32, %arg3: memref<1x4x64xf32, #tpu.memory_space<vmem>>, %arg4: memref<1x4x512xf32, #tpu.memory_space<vmem>>, %arg5: memref<1x64x1xf32, #tpu.memory_space<vmem>>, %arg6: memref<1x64x512xf32, #tpu.memory_space<vmem>>) attributes {dimension_semantics = [#tpu.dimension_semantics<parallel>, #tpu.dimension_semantics<parallel>, #tpu.dimension_semantics<parallel>], iteration_bounds = array<i64: 2, 1, 1>, scalar_prefetch = 0 : i64, scratch_operands = 0 : i64, tpu.core_type = #tpu.core_type<tc>, window_params = [{transform_indices = @transform_0, window_bounds = array<i64: 1, 4, 64>}, {transform_indices = @transform_1, window_bounds = array<i64: 1, 4, 512>}, {transform_indices = @transform_2, window_bounds = array<i64: 1, 64, 1>}, {transform_indices = @transform_3, window_bounds = array<i64: 1, 64, 512>}]} {
    %c0 = arith.constant 0 : index
    %c0_0 = arith.constant 0 : index
    %c0_1 = arith.constant 0 : index
    %0 = vector.load %arg3[%c0, %c0_0, %c0_1] : memref<1x4x64xf32, #tpu.memory_space<vmem>>, vector<1x4x64xf32>
    %1 = vector.shape_cast %0 : vector<1x4x64xf32> to vector<4x64xf32>
    %c0_2 = arith.constant 0 : index
    %c0_3 = arith.constant 0 : index
    %c0_4 = arith.constant 0 : index
    %2 = vector.load %arg4[%c0_2, %c0_3, %c0_4] : memref<1x4x512xf32, #tpu.memory_space<vmem>>, vector<1x4x512xf32>
    %3 = vector.shape_cast %2 : vector<1x4x512xf32> to vector<4x512xf32>
    %c0_5 = arith.constant 0 : index
    %c0_6 = arith.constant 0 : index
    %c0_7 = arith.constant 0 : index
    %4 = vector.load %arg5[%c0_5, %c0_6, %c0_7] : memref<1x64x1xf32, #tpu.memory_space<vmem>>, vector<1x64x1xf32>
    %5 = vector.shape_cast %4 : vector<1x64x1xf32> to vector<64x1xf32>
    %cst = arith.constant dense<0.000000e+00> : vector<64x512xf32>
    %6 = tpu.matmul %1, %3, %cst {dimension_numbers = #tpu.dot_dimension_numbers<[0], [0], [1], [1], [0, 1, 1, 1], [], []>} : vector<4x64xf32>, vector<4x512xf32>, vector<64x512xf32> -> vector<64x512xf32>
    %7 = vector.broadcast %5 : vector<64x1xf32> to vector<64x512xf32>
    %8 = arith.mulf %6, %7 : vector<64x512xf32>
    %c0_8 = arith.constant 0 : index
    %c0_9 = arith.constant 0 : index
    %c0_10 = arith.constant 0 : index
    %9 = vector.load %arg6[%c0_8, %c0_9, %c0_10] : memref<1x64x512xf32, #tpu.memory_space<vmem>>, vector<1x64x512xf32>
    %10 = vector.shape_cast %9 : vector<1x64x512xf32> to vector<64x512xf32>
    %11 = vector.shape_cast %8 : vector<64x512xf32> to vector<1x64x512xf32>
    tpu.vector_store %arg6[%c0_8, %c0_9, %c0_10], %11 {strides = array<i32>} : memref<1x64x512xf32, #tpu.memory_space<vmem>>, vector<1x64x512xf32>,
    return
  }
  func.func @transform_0(%arg0: i32, %arg1: i32, %arg2: i32) -> (i32, i32, i32) {
    %c0_i32 = arith.constant 0 : i32
    %c0_i32_0 = arith.constant 0 : i32
    return %arg0, %c0_i32, %arg1 : i32, i32, i32
  }
  func.func @transform_1(%arg0: i32, %arg1: i32, %arg2: i32) -> (i32, i32, i32) {
    %c0_i32 = arith.constant 0 : i32
    %c0_i32_0 = arith.constant 0 : i32
    return %arg0, %c0_i32, %arg2 : i32, i32, i32
  }
  func.func @transform_2(%arg0: i32, %arg1: i32, %arg2: i32) -> (i32, i32, i32) {
    %c0_i32 = arith.constant 0 : i32
    %c0_i32_0 = arith.constant 0 : i32
    return %arg0, %arg1, %c0_i32 : i32, i32, i32
  }
  func.func @transform_3(%arg0: i32, %arg1: i32, %arg2: i32) -> (i32, i32, i32) {
    %c0_i32 = arith.constant 0 : i32
    return %arg0, %arg1, %arg2 : i32, i32, i32
  }
}

</mosaic_0001>

<llo_original>
// kernel: tpu_custom_call.1
$region0: #{tpu_custom_call.1}
  #allocation0 [shape = 'u32[]', space=smem, size = 0x4, offset = 0x4, fixed_abs, tag = 'smem constant byte address 0x4 - core index']
  #allocation1 [shape = 'u32[144,128]{1,0:T(1,128)}', space=vmem, size = 0x12000, scoped, tag = 'internal scratch']
  %s0 = inlined_call_operand.vmem [shape: f32[2,4,64], index: 0, kind: input, shape index: {}]
  %s1 = inlined_call_operand.vmem [shape: f32[2,4,512], index: 1, kind: input, shape index: {}]
  %s2 = inlined_call_operand.vmem [shape: f32[2,64,1], index: 2, kind: input, shape index: {}]
  %s3 = inlined_call_operand.hbm [shape: f32[2,64,512], index: 3, kind: output, shape index: {}]
  %s4 = sld [smem:[#allocation0]]
  $region45: #{tpu_custom_call.1} parent=0
    _
  %s6 = ssub.s32 1, %s4
  %s7 = scalar_select 0, %s6, %s4
  $region1: #{tpu_custom_call.1} parent=0
    #allocation2 [shape = 'u8[262144]{0}', space=vmem, size = 0x40000, scoped, tag = 'output window, operand 0']
    #allocation3 [shape = 's32[2]{0}', space=sflag, size = 0x8, scoped, tag = 'scoped memory for tpu_custom_call.1']
    %8 = vsyncpa [#allocation3], 0
    %s9 = scalar_lea.sflag [#allocation3], 1
    %10 = vsyncpa %s9, 0
    loop: start=0, step=1, limit=4
    $region2: #{tpu_custom_call.1} parent=1 // loop_pre_header
      _
    $region3: #{tpu_custom_call.1} parent=1 // loop_header
      %s12 = sphi 0, %s16
      %p13 = scmp.ge.s32.totalorder %s12, 4
      %s19 = sphi 0, %s38
      %s20 = sphi 0, %s34
      %s21 = sphi 0, %s30
      %s22 = sphi 0, %s19
      %s23 = sphi 0, %s20
      %s24 = sphi 0, %s21
      %s25 = sphi 0, %s22
      %s26 = sphi 0, %s23
      %s27 = sphi 0, %s24
      %s43 = sphi 0, %s45
      %s46 = sphi 0, %s43
      %s47 = sphi 0, %s46
      %s63 = sphi 0, %s47
      %s71 = sphi 0, %s73
      %s74 = sphi 0, %s71
      %s75 = sphi 0, %s74
      %s91 = sphi 0, %s75
      %s99 = sphi 0, %s101
      %s102 = sphi 0, %s99
      %s103 = sphi 0, %s102
      %s119 = sphi 0, %s103
      %s129 = sphi 0, %s131
      %s132 = sphi 0, %s129
      %s133 = sphi 0, %s132
      %s149 = sphi 0, %s133
    $region4: #{tpu_custom_call.1} parent=1 // loop_header_branch
      %15 = sbr.rel (%p13) target = $region8
    $region5: #{tpu_custom_call.1} parent=1 // loop_body
      %s17 = ssub.s32 %s12, 1
      %s18 = ssub.s32 %s12, 2
      %s28 = sadd.s32 1, %s21
      %p29 = scmp.ge.s32.totalorder %s28, 1
      %s30 = scalar_select %p29, 0, %s28
      %s31 = sadd.s32 1, %s20
      %s32 = scalar_select %p29, %s31, %s20
      %p33 = scmp.ge.s32.totalorder %s32, 1
      %s34 = scalar_select %p33, 0, %s32
      %s35 = sadd.s32 1, %s19
      %s36 = scalar_select %p33, %s35, %s19
      %p37 = scmp.ge.s32.totalorder %s36, 2
      %s38 = scalar_select %p37, 0, %s36
      %s39 = ssub.s32 %s19, %s38
      %s40 = ssub.s32 %s20, %s34
      %s41 = sor.u32 %s39, %s40
      %p42 = scmp.eq.s32.totalorder %s41, 0
      %s44 = sadd.s32 %s43, 1
      %s45 = scalar_select %p42, %s43, %s44
      %p48 = pneg %p42
      %p49 = scmp.eq.s32.totalorder %s12, 1
      %p50 = por %p48, %p49
      %p51 = scmp.ne.s32.totalorder %s43, %s46
      %p52 = scmp.eq.s32.totalorder %s12, 0
      %p53 = por %p51, %p52
      %p54 = scmp.ne.s32.totalorder %s43, %s46
      %p55 = scmp.eq.s32.totalorder %s17, 1
      %p56 = por %p54, %p55
      %p57 = scmp.ne.s32.totalorder %s46, %s47
      %p58 = scmp.eq.s32.totalorder %s17, 0
      %p59 = por %p57, %p58
      %p60 = scmp.ne.s32.totalorder %s46, %s47
      %p61 = scmp.eq.s32.totalorder %s18, 1
      %p62 = por %p60, %p61
      %p64 = scmp.ne.s32.totalorder %s47, %s63
      %p65 = scmp.eq.s32.totalorder %s18, 0
      %p66 = por %p64, %p65
      %s67 = ssub.s32 %s19, %s38
      %s68 = ssub.s32 %s21, %s30
      %s69 = sor.u32 %s67, %s68
      %p70 = scmp.eq.s32.totalorder %s69, 0
      %s72 = sadd.s32 %s71, 1
      %s73 = scalar_select %p70, %s71, %s72
      %p76 = pneg %p70
      %p77 = scmp.eq.s32.totalorder %s12, 1
      %p78 = por %p76, %p77
      %p79 = scmp.ne.s32.totalorder %s71, %s74
      %p80 = scmp.eq.s32.totalorder %s12, 0
      %p81 = por %p79, %p80
      %p82 = scmp.ne.s32.totalorder %s71, %s74
      %p83 = scmp.eq.s32.totalorder %s17, 1
      %p84 = por %p82, %p83
      %p85 = scmp.ne.s32.totalorder %s74, %s75
      %p86 = scmp.eq.s32.totalorder %s17, 0
      %p87 = por %p85, %p86
      %p88 = scmp.ne.s32.totalorder %s74, %s75
      %p89 = scmp.eq.s32.totalorder %s18, 1
      %p90 = por %p88, %p89
      %p92 = scmp.ne.s32.totalorder %s75, %s91
      %p93 = scmp.eq.s32.totalorder %s18, 0
      %p94 = por %p92, %p93
      %s95 = ssub.s32 %s19, %s38
      %s96 = ssub.s32 %s20, %s34
      %s97 = sor.u32 %s95, %s96
      %p98 = scmp.eq.s32.totalorder %s97, 0
      %s100 = sadd.s32 %s99, 1
      %s101 = scalar_select %p98, %s99, %s100
      %p104 = pneg %p98
      %p105 = scmp.eq.s32.totalorder %s12, 1
      %p106 = por %p104, %p105
      %p107 = scmp.ne.s32.totalorder %s99, %s102
      %p108 = scmp.eq.s32.totalorder %s12, 0
      %p109 = por %p107, %p108
      %p110 = scmp.ne.s32.totalorder %s99, %s102
      %p111 = scmp.eq.s32.totalorder %s17, 1
      %p112 = por %p110, %p111
      %p113 = scmp.ne.s32.totalorder %s102, %s103
      %p114 = scmp.eq.s32.totalorder %s17, 0
      %p115 = por %p113, %p114
      %p116 = scmp.ne.s32.totalorder %s102, %s103
      %p117 = scmp.eq.s32.totalorder %s18, 1
      %p118 = por %p116, %p117
      %p120 = scmp.ne.s32.totalorder %s103, %s119
      %p121 = scmp.eq.s32.totalorder %s18, 0
      %p122 = por %p120, %p121
      %s123 = ssub.s32 %s19, %s38
      %s124 = ssub.s32 %s20, %s34
      %s125 = sor.u32 %s123, %s124
      %s126 = ssub.s32 %s21, %s30
      %s127 = sor.u32 %s125, %s126
      %p128 = scmp.eq.s32.totalorder %s127, 0
      %s130 = sadd.s32 %s129, 1
      %s131 = scalar_select %p128, %s129, %s130
      %p134 = pneg %p128
      %p135 = scmp.eq.s32.totalorder %s12, 1
      %p136 = por %p134, %p135
      %p137 = scmp.ne.s32.totalorder %s129, %s132
      %p138 = scmp.eq.s32.totalorder %s12, 0
      %p139 = por %p137, %p138
      %p140 = scmp.ne.s32.totalorder %s129, %s132
      %p141 = scmp.eq.s32.totalorder %s17, 1
      %p142 = por %p140, %p141
      %p143 = scmp.ne.s32.totalorder %s132, %s133
      %p144 = scmp.eq.s32.totalorder %s17, 0
      %p145 = por %p143, %p144
      %p146 = scmp.ne.s32.totalorder %s132, %s133
      %p147 = scmp.eq.s32.totalorder %s18, 1
      %p148 = por %p146, %p147
      %p150 = scmp.ne.s32.totalorder %s133, %s149
      %p151 = scmp.eq.s32.totalorder %s18, 0
      %p152 = por %p150, %p151
      %p153 = scmp.le.s32.totalorder 1, %s12
      %p154 = scmp.lt.s32.totalorder %s12, 3
      %p155 = pnand %p153, %p154
      %p156 = pneg %p155
      // Predicated region
      $region9: #{tpu_custom_call.1} parent=5 // pred_check
        _
      $region10: #{tpu_custom_call.1} parent=5 // pred_check_branch
        %158 = sbr.rel (%p155) target = $region12
      $region11: #{tpu_custom_call.1} parent=5 // pred_region
        %s159 = ssub.s32 %s12, 1
      $region12: #{tpu_custom_call.1} parent=5 // pred_fallthru
        _
      %p160 = scmp.lt.s32.totalorder %s12, 2
      // Predicated region
      $region13: #{tpu_custom_call.1} parent=5 // pred_check
        %p161 = pneg %p160
      $region14: #{tpu_custom_call.1} parent=5 // pred_check_branch
        %163 = sbr.rel (%p161) target = $region16
      $region15: #{tpu_custom_call.1} parent=5 // pred_region
        // Predicated region
        $region17: #{tpu_custom_call.1} parent=15 // pred_check
          %p164 = pneg %p53
        $region18: #{tpu_custom_call.1} parent=15 // pred_check_branch
          %166 = sbr.rel (%p164) target = $region20
        $region19: #{tpu_custom_call.1} parent=15 // pred_region
          %p167 = scmp.lt.s32.totalorder %s19, 1
          %s168 = scalar_select %p167, %s19, 1
          %p169 = scmp.lt.s32.totalorder %s20, 0
          %s170 = scalar_select %p169, %s20, 0
          %s171 = sadd.s32 %s170, %s168
          %s172 = smul.addr %s171, 4
          %s173 = scalar_lea.vmem %s0, %s172
        $region20: #{tpu_custom_call.1} parent=15 // pred_fallthru
          _
        // Predicated region
        $region21: #{tpu_custom_call.1} parent=15 // pred_check
          %p174 = pneg %p81
        $region22: #{tpu_custom_call.1} parent=15 // pred_check_branch
          %176 = sbr.rel (%p174) target = $region24
        $region23: #{tpu_custom_call.1} parent=15 // pred_region
          %s177 = smul.u32 4, %s21
          %p178 = scmp.lt.s32.totalorder %s19, 1
          %s179 = scalar_select %p178, %s19, 1
          %p180 = scmp.lt.s32.totalorder %s177, 3
          %s181 = scalar_select %p180, %s177, 3
          %s182 = smul.addr %s179, 4
          %s183 = sadd.s32 %s181, %s182
          %s184 = smul.addr %s183, 4
          %s185 = scalar_lea.vmem %s1, %s184
          %s186 = smul.u32 4, %s21
        $region24: #{tpu_custom_call.1} parent=15 // pred_fallthru
          _
        // Predicated region
        $region25: #{tpu_custom_call.1} parent=15 // pred_check
          %p187 = pneg %p109
        $region26: #{tpu_custom_call.1} parent=15 // pred_check_branch
          %189 = sbr.rel (%p187) target = $region28
        $region27: #{tpu_custom_call.1} parent=15 // pred_region
          %s190 = smul.u32 8, %s20
          %p191 = scmp.lt.s32.totalorder %s19, 1
          %s192 = scalar_select %p191, %s19, 1
          %p193 = scmp.lt.s32.totalorder %s190, 7
          %s194 = scalar_select %p193, %s190, 7
          %s195 = smul.addr %s192, 8
          %s196 = sadd.s32 %s194, %s195
          %s197 = smul.addr %s196, 8
          %s198 = scalar_lea.vmem %s2, %s197
          %s199 = smul.u32 8, %s20
        $region28: #{tpu_custom_call.1} parent=15 // pred_fallthru
          _
      $region16: #{tpu_custom_call.1} parent=5 // pred_fallthru
        _
      %p200 = scmp.le.s32.totalorder 1, %s12
      %p201 = scmp.lt.s32.totalorder %s12, 3
      %p202 = pnand %p200, %p201
      %p203 = pneg %p202
      // Predicated region
      $region29: #{tpu_custom_call.1} parent=5 // pred_check
        _
      $region30: #{tpu_custom_call.1} parent=5 // pred_check_branch
        %205 = sbr.rel (%p202) target = $region32
      $region31: #{tpu_custom_call.1} parent=5 // pred_region
        %s206 = ssub.s32 %s12, 1
        %p207 = scmp.lt.s32.totalorder %s22, 1
        %s208 = scalar_select %p207, %s22, 1
        %p209 = scmp.lt.s32.totalorder %s23, 0
        %s210 = scalar_select %p209, %s23, 0
        %s211 = sadd.s32 %s210, %s208
        %s212 = smul.addr %s211, 4
        %s213 = scalar_lea.vmem %s0, %s212
        %p214 = pneg %p59
        %p215 = pneg %p56
        %s216 = smul.u32 4, %s24
        %p217 = scmp.lt.s32.totalorder %s22, 1
        %s218 = scalar_select %p217, %s22, 1
        %p219 = scmp.lt.s32.totalorder %s216, 3
        %s220 = scalar_select %p219, %s216, 3
        %s221 = smul.addr %s218, 4
        %s222 = sadd.s32 %s220, %s221
        %s223 = smul.addr %s222, 4
        %s224 = scalar_lea.vmem %s1, %s223
        %p225 = pneg %p87
        %p226 = pneg %p84
        %s227 = smul.u32 8, %s23
        %p228 = scmp.lt.s32.totalorder %s22, 1
        %s229 = scalar_select %p228, %s22, 1
        %p230 = scmp.lt.s32.totalorder %s227, 7
        %s231 = scalar_select %p230, %s227, 7
        %s232 = smul.addr %s229, 8
        %s233 = sadd.s32 %s231, %s232
        %s234 = smul.addr %s233, 8
        %s235 = scalar_lea.vmem %s2, %s234
        %p236 = pneg %p115
        %p237 = pneg %p112
        %p238 = pneg %p145
        %p239 = pneg %p142
        %s240 = sand.u32 %s132, 1
        %s241 = scalar_lea.sflag [#allocation3], %s240
        %s242 = sand.u32 %s132, 1
        %s243 = smul.addr %s242, 256
        %s244 = scalar_lea.vmem [#allocation2], %s243
        %p245 = scmp.lt.s32.totalorder %s22, 1
        %s246 = scalar_select %p245, %s22, 1
        %p247 = scmp.lt.s32.totalorder %s23, 0
        %s248 = scalar_select %p247, %s23, 0
        %s249 = sadd.s32 %s248, %s246
        %s250 = smul.addr %s249, 4
        %s251 = scalar_lea.vmem %s0, %s250
        %s252 = smul.u32 4, %s24
        %p253 = scmp.lt.s32.totalorder %s22, 1
        %s254 = scalar_select %p253, %s22, 1
        %p255 = scmp.lt.s32.totalorder %s252, 3
        %s256 = scalar_select %p255, %s252, 3
        %s257 = smul.addr %s254, 4
        %s258 = sadd.s32 %s256, %s257
        %s259 = smul.addr %s258, 4
        %s260 = scalar_lea.vmem %s1, %s259
        %s261 = smul.u32 4, %s24
        %s262 = smul.u32 8, %s23
        %p263 = scmp.lt.s32.totalorder %s22, 1
        %s264 = scalar_select %p263, %s22, 1
        %p265 = scmp.lt.s32.totalorder %s262, 7
        %s266 = scalar_select %p265, %s262, 7
        %s267 = smul.addr %s264, 8
        %s268 = sadd.s32 %s266, %s267
        %s269 = smul.addr %s268, 8
        %s270 = scalar_lea.vmem %s2, %s269
        %s271 = smul.u32 8, %s23
        %s272 = smul.u32 8, %s23
        %s273 = smul.u32 4, %s24
        %v274 = vld [vmem:[%s251] sm:$0xf]
        %v275 = vld [vmem:[%s260] sm:$0xff]
        %v276 = vld [vmem:[%s260 + $0x8] sm:$0xff]
        %v277 = vld [vmem:[%s270] sm:$0xff]
        %v278 = vld [vmem:[%s270 + $0x8] sm:$0xff]
        %v279 = vld [vmem:[%s270 + $0x10] sm:$0xff]
        %v280 = vld [vmem:[%s270 + $0x18] sm:$0xff]
        %v281 = vld [vmem:[%s270 + $0x20] sm:$0xff]
        %v282 = vld [vmem:[%s270 + $0x28] sm:$0xff]
        %v283 = vld [vmem:[%s270 + $0x30] sm:$0xff]
        %v284 = vld [vmem:[%s270 + $0x38] sm:$0xff]
        %285 = vxpose.xlu0.b32.start [1/16] %v274, 128
        %286 = vxpose.xlu0.b32.cont [2/16] 0.0, 128
        %287 = vxpose.xlu0.b32.cont [3/16] 0.0, 128
        %288 = vxpose.xlu0.b32.cont [4/16] 0.0, 128
        %289 = vxpose.xlu0.b32.cont [5/16] 0.0, 128
        %290 = vxpose.xlu0.b32.cont [6/16] 0.0, 128
        %291 = vxpose.xlu0.b32.cont [7/16] 0.0, 128
        %292 = vxpose.xlu0.b32.cont [8/16] 0.0, 128
        %293 = vxpose.xlu0.b32.cont [9/16] 0.0, 128
        %294 = vxpose.xlu0.b32.cont [10/16] 0.0, 128
        %295 = vxpose.xlu0.b32.cont [11/16] 0.0, 128
        %296 = vxpose.xlu0.b32.cont [12/16] 0.0, 128
        %297 = vxpose.xlu0.b32.cont [13/16] 0.0, 128
        %298 = vxpose.xlu0.b32.cont [14/16] 0.0, 128
        %299 = vxpose.xlu0.b32.cont [15/16] 0.0, 128
        %300 = vxpose.xlu0.b32.end [16/16] 0.0, 128
        %v301 = vpop.trf.xlu0
        %v302 = vpop.trf.xlu0
        %v303 = vpop.trf.xlu0
        %v304 = vpop.trf.xlu0
        %v305 = vpop.trf.xlu0
        %v306 = vpop.trf.xlu0
        %v307 = vpop.trf.xlu0
        %v308 = vpop.trf.xlu0
        %v309 = vpop.trf.xlu0
        %v310 = vpop.trf.xlu0
        %v311 = vpop.trf.xlu0
        %v312 = vpop.trf.xlu0
        %v313 = vpop.trf.xlu0
        %v314 = vpop.trf.xlu0
        %v315 = vpop.trf.xlu0
        %v316 = vpop.trf.xlu0
        %v319 = vcombine.high %v275, %v275
        %v320 = vcombine.high %v276, %v276
        %vm321 = vcmask 31744
        %v323 = vsel %vm321, %v301, 0
        %v326 = vsel %vm321, %v302, 0
        %v329 = vsel %vm321, %v303, 0
        %v332 = vsel %vm321, %v304, 0
        %v335 = vsel %vm321, %v305, 0
        %v338 = vsel %vm321, %v306, 0
        %v341 = vsel %vm321, %v307, 0
        %v344 = vsel %vm321, %v308, 0
        %vm346 = vcmask 1043456
        %v347 = vsel %vm346, %v275, 0
        %v349 = vsel %vm346, %v319, 0
        %v351 = vsel %vm346, %v276, 0
        %v353 = vsel %vm346, %v320, 0
        %355 = vmatprep.subr.mxu0 %v349
        %356 = vmatpush1.msra.mxu0 %v347
        %357 = vmatprep.subr.mxu0 0.0
        %358 = vmatpush1.msra.mxu0 0.0
        %359 = vmatprep.subr.mxu0 0.0
        %360 = vmatpush1.msra.mxu0 0.0
        %361 = vmatprep.subr.mxu0 0.0
        %362 = vmatpush1.msra.mxu0 0.0
        %363 = vmatprep.subr.mxu0 0.0
        %364 = vmatpush1.msra.mxu0 0.0
        %365 = vmatprep.subr.mxu0 0.0
        %366 = vmatpush1.msra.mxu0 0.0
        %367 = vmatprep.subr.mxu0 0.0
        %368 = vmatpush1.msra.mxu0 0.0
        %369 = vmatprep.subr.mxu0 0.0
        %370 = vmatpush1.msra.mxu0 0.0
        %371 = vmatprep.subr.mxu0 0.0
        %372 = vmatpush1.msra.mxu0 0.0
        %373 = vmatprep.subr.mxu0 0.0
        %374 = vmatpush1.msra.mxu0 0.0
        %375 = vmatprep.subr.mxu0 0.0
        %376 = vmatpush1.msra.mxu0 0.0
        %377 = vmatprep.subr.mxu0 0.0
        %378 = vmatpush1.msra.mxu0 0.0
        %379 = vmatprep.subr.mxu0 0.0
        %380 = vmatpush1.msra.mxu0 0.0
        %381 = vmatprep.subr.mxu0 0.0
        %382 = vmatpush1.msra.mxu0 0.0
        %383 = vmatprep.subr.mxu0 0.0
        %384 = vmatpush1.msra.mxu0 0.0
        %385 = vmatprep.subr.mxu0 0.0
        %386 = vmatpush1.msra.mxu0 0.0
        %387 = vmatprep.subr.mxu0 0.0
        %388 = vmatpush1.msra.mxu0 0.0
        %389 = vmatprep.subr.mxu0 0.0
        %390 = vmatpush1.msra.mxu0 0.0
        %391 = vmatprep.subr.mxu0 0.0
        %392 = vmatpush1.msra.mxu0 0.0
        %393 = vmatprep.subr.mxu0 0.0
        %394 = vmatpush1.msra.mxu0 0.0
        %395 = vmatprep.subr.mxu0 0.0
        %396 = vmatpush1.msra.mxu0 0.0
        %397 = vmatprep.subr.mxu0 0.0
        %398 = vmatpush1.msra.mxu0 0.0
        %399 = vmatprep.subr.mxu0 0.0
        %400 = vmatpush1.msra.mxu0 0.0
        %401 = vmatprep.subr.mxu0 0.0
        %402 = vmatpush1.msra.mxu0 0.0
        %403 = vmatprep.subr.mxu0 0.0
        %404 = vmatpush1.msra.mxu0 0.0
        %405 = vmatprep.subr.mxu0 0.0
        %406 = vmatpush1.msra.mxu0 0.0
        %407 = vmatprep.subr.mxu0 0.0
        %408 = vmatpush1.msra.mxu0 0.0
        %409 = vmatprep.subr.mxu0 0.0
        %410 = vmatpush1.msra.mxu0 0.0
        %411 = vmatprep.subr.mxu0 0.0
        %412 = vmatpush1.msra.mxu0 0.0
        %413 = vmatprep.subr.mxu0 0.0
        %414 = vmatpush1.msra.mxu0 0.0
        %415 = vmatprep.subr.mxu0 0.0
        %416 = vmatpush1.msra.mxu0 0.0
        %417 = vmatprep.subr.mxu0 0.0
        %418 = vmatpush1.msra.mxu0 0.0
        %419 = vmatprep.mubr.f32.mxu0 0.0
        %420 = vmatmul.mubr.f32.gmra.mrb[0].mxu0 %v323
        %v421 = vpop.f32.mrb[0].mxu0
        %v422 = vadd.f32 0.0, %v421
        %v423 = vpop.f32.mrb[0].mxu0
        %v424 = vadd.f32 0.0, %v423
        %425 = vmatprep.mubr.f32.mxu0 0.0
        %426 = vmatmul.mubr.f32.gmra.mrb[0].mxu0 %v326
        %v427 = vpop.f32.mrb[0].mxu0
        %v428 = vadd.f32 0.0, %v427
        %v429 = vpop.f32.mrb[0].mxu0
        %v430 = vadd.f32 0.0, %v429
        %431 = vmatprep.mubr.f32.mxu0 0.0
        %432 = vmatmul.mubr.f32.gmra.mrb[0].mxu0 %v329
        %v433 = vpop.f32.mrb[0].mxu0
        %v434 = vadd.f32 0.0, %v433
        %v435 = vpop.f32.mrb[0].mxu0
        %v436 = vadd.f32 0.0, %v435
        %437 = vmatprep.mubr.f32.mxu0 0.0
        %438 = vmatmul.mubr.f32.gmra.mrb[0].mxu0 %v332
        %v439 = vpop.f32.mrb[0].mxu0
        %v440 = vadd.f32 0.0, %v439
        %v441 = vpop.f32.mrb[0].mxu0
        %v442 = vadd.f32 0.0, %v441
        %443 = vmatprep.mubr.f32.mxu0 0.0
        %444 = vmatmul.mubr.f32.gmra.mrb[0].mxu0 %v335
        %v445 = vpop.f32.mrb[0].mxu0
        %v446 = vadd.f32 0.0, %v445
        %v447 = vpop.f32.mrb[0].mxu0
        %v448 = vadd.f32 0.0, %v447
        %449 = vmatprep.mubr.f32.mxu0 0.0
        %450 = vmatmul.mubr.f32.gmra.mrb[0].mxu0 %v338
        %v451 = vpop.f32.mrb[0].mxu0
        %v452 = vadd.f32 0.0, %v451
        %v453 = vpop.f32.mrb[0].mxu0
        %v454 = vadd.f32 0.0, %v453
        %455 = vmatprep.mubr.f32.mxu0 0.0
        %456 = vmatmul.mubr.f32.gmra.mrb[0].mxu0 %v341
        %v457 = vpop.f32.mrb[0].mxu0
        %v458 = vadd.f32 0.0, %v457
        %v459 = vpop.f32.mrb[0].mxu0
        %v460 = vadd.f32 0.0, %v459
        %461 = vmatprep.mubr.f32.mxu0 0.0
        %462 = vmatmul.mubr.f32.gmra.mrb[0].mxu0 %v344
        %v463 = vpop.f32.mrb[0].mxu0
        %v464 = vadd.f32 0.0, %v463
        %v465 = vpop.f32.mrb[0].mxu0
        %v466 = vadd.f32 0.0, %v465
        %467 = vdwg.mxu0
        %468 = vmatprep.subr.mxu0 %v353
        %469 = vmatpush1.msra.mxu0 %v351
        %470 = vmatprep.subr.mxu0 0.0
        %471 = vmatpush1.msra.mxu0 0.0
        %472 = vmatprep.subr.mxu0 0.0
        %473 = vmatpush1.msra.mxu0 0.0
        %474 = vmatprep.subr.mxu0 0.0
        %475 = vmatpush1.msra.mxu0 0.0
        %476 = vmatprep.subr.mxu0 0.0
        %477 = vmatpush1.msra.mxu0 0.0
        %478 = vmatprep.subr.mxu0 0.0
        %479 = vmatpush1.msra.mxu0 0.0
        %480 = vmatprep.subr.mxu0 0.0
        %481 = vmatpush1.msra.mxu0 0.0
        %482 = vmatprep.subr.mxu0 0.0
        %483 = vmatpush1.msra.mxu0 0.0
        %484 = vmatprep.subr.mxu0 0.0
        %485 = vmatpush1.msra.mxu0 0.0
        %486 = vmatprep.subr.mxu0 0.0
        %487 = vmatpush1.msra.mxu0 0.0
        %488 = vmatprep.subr.mxu0 0.0
        %489 = vmatpush1.msra.mxu0 0.0
        %490 = vmatprep.subr.mxu0 0.0
        %491 = vmatpush1.msra.mxu0 0.0
        %492 = vmatprep.subr.mxu0 0.0
        %493 = vmatpush1.msra.mxu0 0.0
        %494 = vmatprep.subr.mxu0 0.0
        %495 = vmatpush1.msra.mxu0 0.0
        %496 = vmatprep.subr.mxu0 0.0
        %497 = vmatpush1.msra.mxu0 0.0
        %498 = vmatprep.subr.mxu0 0.0
        %499 = vmatpush1.msra.mxu0 0.0
        %500 = vmatprep.subr.mxu0 0.0
        %501 = vmatpush1.msra.mxu0 0.0
        %502 = vmatprep.subr.mxu0 0.0
        %503 = vmatpush1.msra.mxu0 0.0
        %504 = vmatprep.subr.mxu0 0.0
        %505 = vmatpush1.msra.mxu0 0.0
        %506 = vmatprep.subr.mxu0 0.0
        %507 = vmatpush1.msra.mxu0 0.0
        %508 = vmatprep.subr.mxu0 0.0
        %509 = vmatpush1.msra.mxu0 0.0
        %510 = vmatprep.subr.mxu0 0.0
        %511 = vmatpush1.msra.mxu0 0.0
        %512 = vmatprep.subr.mxu0 0.0
        %513 = vmatpush1.msra.mxu0 0.0
        %514 = vmatprep.subr.mxu0 0.0
        %515 = vmatpush1.msra.mxu0 0.0
        %516 = vmatprep.subr.mxu0 0.0
        %517 = vmatpush1.msra.mxu0 0.0
        %518 = vmatprep.subr.mxu0 0.0
        %519 = vmatpush1.msra.mxu0 0.0
        %520 = vmatprep.subr.mxu0 0.0
        %521 = vmatpush1.msra.mxu0 0.0
        %522 = vmatprep.subr.mxu0 0.0
        %523 = vmatpush1.msra.mxu0 0.0
        %524 = vmatprep.subr.mxu0 0.0
        %525 = vmatpush1.msra.mxu0 0.0
        %526 = vmatprep.subr.mxu0 0.0
        %527 = vmatpush1.msra.mxu0 0.0
        %528 = vmatprep.subr.mxu0 0.0
        %529 = vmatpush1.msra.mxu0 0.0
        %530 = vmatprep.subr.mxu0 0.0
        %531 = vmatpush1.msra.mxu0 0.0
        %532 = vmatprep.mubr.f32.mxu0 0.0
        %533 = vmatmul.mubr.f32.gmra.mrb[0].mxu0 %v323
        %v534 = vpop.f32.mrb[0].mxu0
        %v535 = vadd.f32 0.0, %v534
        %v536 = vpop.f32.mrb[0].mxu0
        %v537 = vadd.f32 0.0, %v536
        %538 = vmatprep.mubr.f32.mxu0 0.0
        %539 = vmatmul.mubr.f32.gmra.mrb[0].mxu0 %v326
        %v540 = vpop.f32.mrb[0].mxu0
        %v541 = vadd.f32 0.0, %v540
        %v542 = vpop.f32.mrb[0].mxu0
        %v543 = vadd.f32 0.0, %v542
        %544 = vmatprep.mubr.f32.mxu0 0.0
        %545 = vmatmul.mubr.f32.gmra.mrb[0].mxu0 %v329
        %v546 = vpop.f32.mrb[0].mxu0
        %v547 = vadd.f32 0.0, %v546
        %v548 = vpop.f32.mrb[0].mxu0
        %v549 = vadd.f32 0.0, %v548
        %550 = vmatprep.mubr.f32.mxu0 0.0
        %551 = vmatmul.mubr.f32.gmra.mrb[0].mxu0 %v332
        %v552 = vpop.f32.mrb[0].mxu0
        %v553 = vadd.f32 0.0, %v552
        %v554 = vpop.f32.mrb[0].mxu0
        %v555 = vadd.f32 0.0, %v554
        %556 = vmatprep.mubr.f32.mxu0 0.0
        %557 = vmatmul.mubr.f32.gmra.mrb[0].mxu0 %v335
        %v558 = vpop.f32.mrb[0].mxu0
        %v559 = vadd.f32 0.0, %v558
        %v560 = vpop.f32.mrb[0].mxu0
        %v561 = vadd.f32 0.0, %v560
        %562 = vmatprep.mubr.f32.mxu0 0.0
        %563 = vmatmul.mubr.f32.gmra.mrb[0].mxu0 %v338
        %v564 = vpop.f32.mrb[0].mxu0
        %v565 = vadd.f32 0.0, %v564
        %v566 = vpop.f32.mrb[0].mxu0
        %v567 = vadd.f32 0.0, %v566
        %568 = vmatprep.mubr.f32.mxu0 0.0
        %569 = vmatmul.mubr.f32.gmra.mrb[0].mxu0 %v341
        %v570 = vpop.f32.mrb[0].mxu0
        %v571 = vadd.f32 0.0, %v570
        %v572 = vpop.f32.mrb[0].mxu0
        %v573 = vadd.f32 0.0, %v572
        %574 = vmatprep.mubr.f32.mxu0 0.0
        %575 = vmatmul.mubr.f32.gmra.mrb[0].mxu0 %v344
        %v576 = vpop.f32.mrb[0].mxu0
        %v577 = vadd.f32 0.0, %v576
        %v578 = vpop.f32.mrb[0].mxu0
        %v579 = vadd.f32 0.0, %v578
        %580 = vdwg.mxu0
        %582 = vset.pattern.permute.xlu0 0
        %583 = vperm.xlu0 %582, %v277
        %v584 = vpop.permute.xlu0 %583
        %587 = vset.pattern.permute.xlu0 0
        %588 = vperm.xlu0 %587, %v278
        %v589 = vpop.permute.xlu0 %588
        %592 = vset.pattern.permute.xlu0 0
        %593 = vperm.xlu0 %592, %v279
        %v594 = vpop.permute.xlu0 %593
        %597 = vset.pattern.permute.xlu0 0
        %598 = vperm.xlu0 %597, %v280
        %v599 = vpop.permute.xlu0 %598
        %602 = vset.pattern.permute.xlu0 0
        %603 = vperm.xlu0 %602, %v281
        %v604 = vpop.permute.xlu0 %603
        %607 = vset.pattern.permute.xlu0 0
        %608 = vperm.xlu0 %607, %v282
        %v609 = vpop.permute.xlu0 %608
        %612 = vset.pattern.permute.xlu0 0
        %613 = vperm.xlu0 %612, %v283
        %v614 = vpop.permute.xlu0 %613
        %617 = vset.pattern.permute.xlu0 0
        %618 = vperm.xlu0 %617, %v284
        %v619 = vpop.permute.xlu0 %618
        %v621 = vmul.f32 %v422, %v584
        %v622 = vmul.f32 %v424, %v584
        %v623 = vmul.f32 %v535, %v584
        %v624 = vmul.f32 %v537, %v584
        %v625 = vmul.f32 %v428, %v589
        %v626 = vmul.f32 %v430, %v589
        %v627 = vmul.f32 %v541, %v589
        %v628 = vmul.f32 %v543, %v589
        %v629 = vmul.f32 %v434, %v594
        %v630 = vmul.f32 %v436, %v594
        %v631 = vmul.f32 %v547, %v594
        %v632 = vmul.f32 %v549, %v594
        %v633 = vmul.f32 %v440, %v599
        %v634 = vmul.f32 %v442, %v599
        %v635 = vmul.f32 %v553, %v599
        %v636 = vmul.f32 %v555, %v599
        %v637 = vmul.f32 %v446, %v604
        %v638 = vmul.f32 %v448, %v604
        %v639 = vmul.f32 %v559, %v604
        %v640 = vmul.f32 %v561, %v604
        %v641 = vmul.f32 %v452, %v609
        %v642 = vmul.f32 %v454, %v609
        %v643 = vmul.f32 %v565, %v609
        %v644 = vmul.f32 %v567, %v609
        %v645 = vmul.f32 %v458, %v614
        %v646 = vmul.f32 %v460, %v614
        %v647 = vmul.f32 %v571, %v614
        %v648 = vmul.f32 %v573, %v614
        %v649 = vmul.f32 %v464, %v619
        %v650 = vmul.f32 %v466, %v619
        %v651 = vmul.f32 %v577, %v619
        %v652 = vmul.f32 %v579, %v619
        %653 = vst [vmem:[%s244] sm:$0xff] %v621
        %654 = vst [vmem:[%s244 + $0x8] sm:$0xff] %v622
        %655 = vst [vmem:[%s244 + $0x10] sm:$0xff] %v623
        %656 = vst [vmem:[%s244 + $0x18] sm:$0xff] %v624
        %657 = vst [vmem:[%s244 + $0x20] sm:$0xff] %v625
        %658 = vst [vmem:[%s244 + $0x28] sm:$0xff] %v626
        %659 = vst [vmem:[%s244 + $0x30] sm:$0xff] %v627
        %660 = vst [vmem:[%s244 + $0x38] sm:$0xff] %v628
        %661 = vst [vmem:[%s244 + $0x40] sm:$0xff] %v629
        %662 = vst [vmem:[%s244 + $0x48] sm:$0xff] %v630
        %663 = vst [vmem:[%s244 + $0x50] sm:$0xff] %v631
        %664 = vst [vmem:[%s244 + $0x58] sm:$0xff] %v632
        %665 = vst [vmem:[%s244 + $0x60] sm:$0xff] %v633
        %666 = vst [vmem:[%s244 + $0x68] sm:$0xff] %v634
        %667 = vst [vmem:[%s244 + $0x70] sm:$0xff] %v635
        %668 = vst [vmem:[%s244 + $0x78] sm:$0xff] %v636
        %669 = vst [vmem:[%s244 + $0x80] sm:$0xff] %v637
        %670 = vst [vmem:[%s244 + $0x88] sm:$0xff] %v638
        %671 = vst [vmem:[%s244 + $0x90] sm:$0xff] %v639
        %672 = vst [vmem:[%s244 + $0x98] sm:$0xff] %v640
        %673 = vst [vmem:[%s244 + $0xa0] sm:$0xff] %v641
        %674 = vst [vmem:[%s244 + $0xa8] sm:$0xff] %v642
        %675 = vst [vmem:[%s244 + $0xb0] sm:$0xff] %v643
        %676 = vst [vmem:[%s244 + $0xb8] sm:$0xff] %v644
        %677 = vst [vmem:[%s244 + $0xc0] sm:$0xff] %v645
        %678 = vst [vmem:[%s244 + $0xc8] sm:$0xff] %v646
        %679 = vst [vmem:[%s244 + $0xd0] sm:$0xff] %v647
        %680 = vst [vmem:[%s244 + $0xd8] sm:$0xff] %v648
        %681 = vst [vmem:[%s244 + $0xe0] sm:$0xff] %v649
        %682 = vst [vmem:[%s244 + $0xe8] sm:$0xff] %v650
        %683 = vst [vmem:[%s244 + $0xf0] sm:$0xff] %v651
        %684 = vst [vmem:[%s244 + $0xf8] sm:$0xff] %v652
        %s685 = sand.u32 %s132, 1
        %s686 = scalar_lea.sflag [#allocation3], %s685
        %s687 = sand.u32 %s132, 1
        %s688 = smul.addr %s687, 256
        %s689 = scalar_lea.vmem [#allocation2], %s688
        // Predicated region
        $region33: #{tpu_custom_call.1} parent=31 // pred_check
          %p690 = pneg %p142
        $region34: #{tpu_custom_call.1} parent=31 // pred_check_branch
          %692 = sbr.rel (%p690) target = $region36
        $region35: #{tpu_custom_call.1} parent=31 // pred_region
          %s693 = smul.u32 8, %s23
          %s694 = smul.u32 4, %s24
          %s696 = ssub.s32 4096, 4096
          %697 = vsyncadd %s686, %s696
          %s698 = smul.addr %s693, 4
          %s699 = sadd.s32 %s694, %s698
          %s700 = smul.addr %s22, 32
          %s701 = sadd.s32 %s699, %s700
          %s702 = smul.addr %s701, 128
          %s703 = scalar_lea.hbm %s3, %s702
          %s704 = sshll.u32 %s689, 4
          %s705 = int_to_ptr.vmem [resolvable:$true] %s704
          %710 = dma.vmem_to_hbm [thread:$0]  %s705, 4096, %s703, %s686, 512, 512, 32
        $region36: #{tpu_custom_call.1} parent=31 // pred_fallthru
          _
      $region32: #{tpu_custom_call.1} parent=5 // pred_fallthru
        _
      %p711 = scmp.le.s32.totalorder 2, %s12
      // Predicated region
      $region37: #{tpu_custom_call.1} parent=5 // pred_check
        %p712 = pneg %p711
      $region38: #{tpu_custom_call.1} parent=5 // pred_check_branch
        %714 = sbr.rel (%p712) target = $region40
      $region39: #{tpu_custom_call.1} parent=5 // pred_region
        %s715 = ssub.s32 %s12, 2
        // Predicated region
        $region41: #{tpu_custom_call.1} parent=39 // pred_check
          %p716 = pneg %p148
        $region42: #{tpu_custom_call.1} parent=39 // pred_check_branch
          %718 = sbr.rel (%p716) target = $region44
        $region43: #{tpu_custom_call.1} parent=39 // pred_region
          %s719 = sand.u32 %s133, 1
          %s720 = scalar_lea.sflag [#allocation3], %s719
          %s721 = sand.u32 %s133, 1
          %s722 = smul.addr %s721, 256
          %s723 = scalar_lea.vmem [#allocation2], %s722
          %724 = dma.done %s720, 4096
        $region44: #{tpu_custom_call.1} parent=39 // pred_fallthru
          _
      $region40: #{tpu_custom_call.1} parent=5 // pred_fallthru
        _
    $region6: #{tpu_custom_call.1} parent=1 // loop_footer
      %s16 = sadd.s32 1, %s12
    $region7: #{tpu_custom_call.1} parent=1 // loop_footer_branch
      %11 = sbr.rel target = $region3
    $region8: #{tpu_custom_call.1} parent=1 // loop_exit
      _
    %725 = vsyncpa [#allocation3], 1
    %s726 = scalar_lea.sflag [#allocation3], 1
    %727 = vsyncpa %s726, 1

</llo_original>
